<compile_context>
chip_gen: v6e
topology: v6e:2x2x1
jax: 0.10.0
libtpu: 0.0.40
codegen_flags: <defaults>
</compile_context>

<pallas_src>
import functools

import jax
import jax.numpy as jnp
from jax.experimental import pallas as pl
from jax.experimental.pallas import tpu as pltpu


def _splat_kernel(x_ref, wconv_ref, bconv_ref, w1_ref, b1_ref, w2_ref, b2_ref,
                  mask_ref, out_ref, xpad_ref, xcol_ref,
                  *, H, W, C_in, channels, radix, pad_l, pad_r):
    HW = H * W
    rchannel = channels * radix

    # Stage the row-flattened image with lane-aligned zero margins on both
    # sides (they implement the pad=1 rows of the 3x3 conv).  Only the margins
    # are re-zeroed (aligned 128-lane tiles); the centre is overwritten.
    xpad_ref[:, 0:pad_l] = jnp.zeros((C_in, pad_l), dtype=jnp.float32)
    xpad_ref[:, pad_l + HW:pad_l + HW + pad_r] = jnp.zeros((C_in, pad_r),
                                                           dtype=jnp.float32)
    xpad_ref[:, pad_l:pad_l + HW] = x_ref[0]

    # im2col: stack the 9 lane-shifted (and horizontally masked) flat views
    # along the sublane axis.  Column wrap-around of the flat taps is fixed
    # with the precomputed masks (kw=0 / kw=2 taps only).
    for kh in range(3):
        for kw in range(3):
            t = kh * 3 + kw
            start = pad_l + (kh - 1) * W + (kw - 1)
            tap = xpad_ref[:, start:start + HW]               # (C_in, HW)
            if kw == 0:                                       # reading x[., w-1]
                tap = tap * mask_ref[0:1, :]
            elif kw == 2:                                     # reading x[., w+1]
                tap = tap * mask_ref[1:2, :]
            xcol_ref[t * C_in:(t + 1) * C_in, :] = tap

    # Whole 3x3 grouped conv as ONE MXU matmul (group sparsity folded as zeros
    # into the dense per-tap weights, taps concatenated on the contraction dim)
    # + bias + ReLU.
    conv = jnp.dot(wconv_ref[...], xcol_ref[...],
                   preferred_element_type=jnp.float32)        # (rchannel, HW)
    conv = jnp.maximum(conv + bconv_ref[...], 0.0)

    # Split-sum over radix + global average pool -> (channels, 1).
    gap = conv[0:channels, :]
    for r in range(1, radix):
        gap = gap + conv[r * channels:(r + 1) * channels, :]
    gap = jnp.sum(gap, axis=1, keepdims=True) * (1.0 / HW)

    # fc1 -> ReLU -> fc2 (dense; group structure folded as zeros in wrapper,
    # fc2 rows pre-permuted into rSoftMax output order).
    h1 = jnp.maximum(
        jnp.dot(w1_ref[...], gap, preferred_element_type=jnp.float32)
        + b1_ref[...], 0.0)                                   # (inter, 1)
    a = jnp.dot(w2_ref[...], h1,
                preferred_element_type=jnp.float32) + b2_ref[...]  # (rchannel, 1)

    # rSoftMax over the radix axis (or sigmoid when radix == 1).
    if radix > 1:
        a_r = [a[r * channels:(r + 1) * channels, :] for r in range(radix)]
        m = a_r[0]
        for r in range(1, radix):
            m = jnp.maximum(m, a_r[r])
        e_r = [jnp.exp(ar - m) for ar in a_r]
        s = e_r[0]
        for r in range(1, radix):
            s = s + e_r[r]
        att = [e / s for e in e_r]
    else:
        att = [1.0 / (1.0 + jnp.exp(-a))]

    # Attention-weighted sum of the radix splits -> (channels, HW), lane-dense.
    out = att[0] * conv[0:channels, :]
    for r in range(1, radix):
        out = out + att[r] * conv[r * channels:(r + 1) * channels, :]
    out_ref[0] = out.astype(out_ref.dtype)


def _group_dense_2d(w, groups):
    """(C_out, C_in_per_group) grouped weight -> dense (C_out, C_in) block-diag."""
    c_out, c_in_g = w.shape
    c_out_g = c_out // groups
    full = jnp.zeros((c_out, c_in_g * groups), w.dtype)
    for g in range(groups):
        full = full.at[g * c_out_g:(g + 1) * c_out_g,
                       g * c_in_g:(g + 1) * c_in_g].set(
                           w[g * c_out_g:(g + 1) * c_out_g])
    return full


def splat_conv2d(x_nchw, w_conv, b_conv, w_fc1, b_fc1, w_fc2, b_fc2,
                 *, channels, radix=2, cardinality=1):
    """SplAtConv2d forward (3x3, stride 1, pad 1). x_nchw: (N, C_in, H, W) f32."""
    N, C_in, H, W = x_nchw.shape
    rchannel = channels * radix
    inter = w_fc1.shape[0]
    G = cardinality * radix
    HW = H * W
    assert W + 1 <= 128, "kernel assumes W <= 127 (flat zero margins)"
    pad_l = 128                       # lane-aligned left margin (>= W+1)
    pad_r = 128                       # lane-aligned right margin (>= W+1)
    P = pad_l + HW + pad_r

    # ---- one-time parameter prep (plain JAX, outside the hot path) ----
    # Grouped 3x3 conv -> dense per-tap weights, taps concatenated along the
    # contraction axis (tap order kh*3+kw matches the in-kernel im2col order).
    w_taps = [_group_dense_2d(w_conv[:, :, kh, kw], G)
              for kh in range(3) for kw in range(3)]
    w_flat = jnp.concatenate(w_taps, axis=1)                   # (rchannel, 9*C_in)
    bconv = b_conv.reshape(rchannel, 1)
    w1 = _group_dense_2d(w_fc1[:, :, 0, 0], cardinality)       # (inter, channels)
    b1 = b_fc1.reshape(inter, 1)
    w2 = _group_dense_2d(w_fc2[:, :, 0, 0], cardinality)       # (rchannel, inter)
    # Pre-permute fc2 output channels into rSoftMax (radix-major) order.
    cpc = channels // cardinality
    perm = jnp.asarray([k * radix * cpc + r * cpc + i
                        for r in range(radix)
                        for k in range(cardinality)
                        for i in range(cpc)], dtype=jnp.int32)
    w2p = jnp.take(w2, perm, axis=0)
    b2p = jnp.take(b_fc2, perm, axis=0).reshape(rchannel, 1)

    # Column-wrap validity masks for the horizontal taps (kw=0 and kw=2).
    col = jnp.arange(HW, dtype=jnp.int32) % W
    mask_l = (col >= 1).astype(jnp.float32).reshape(1, HW)
    mask_r = (col <= W - 2).astype(jnp.float32).reshape(1, HW)
    masks = jnp.concatenate([mask_l, mask_r], axis=0)          # (2, HW)

    x_flat = x_nchw.reshape(N, C_in, HW)                       # free reshape (NCHW kept)

    kernel = functools.partial(_splat_kernel, H=H, W=W, C_in=C_in,
                               channels=channels, radix=radix,
                               pad_l=pad_l, pad_r=pad_r)

    out = pl.pallas_call(
        kernel,
        out_shape=jax.ShapeDtypeStruct((N, channels, HW), jnp.float32),
        grid_spec=pltpu.PrefetchScalarGridSpec(
            num_scalar_prefetch=0,
            grid=(N,),
            in_specs=[
                pl.BlockSpec((1, C_in, HW), lambda n: (n, 0, 0)),
                pl.BlockSpec((rchannel, 9 * C_in), lambda n: (0, 0)),
                pl.BlockSpec((rchannel, 1), lambda n: (0, 0)),
                pl.BlockSpec((inter, channels), lambda n: (0, 0)),
                pl.BlockSpec((inter, 1), lambda n: (0, 0)),
                pl.BlockSpec((rchannel, inter), lambda n: (0, 0)),
                pl.BlockSpec((rchannel, 1), lambda n: (0, 0)),
                pl.BlockSpec((2, HW), lambda n: (0, 0)),
            ],
            out_specs=pl.BlockSpec((1, channels, HW), lambda n: (n, 0, 0)),
            scratch_shapes=[
                pltpu.VMEM((C_in, P), jnp.float32),            # zero-margined flat image
                pltpu.VMEM((9 * C_in, HW), jnp.float32),       # im2col stack
            ],
        ),
        compiler_params=pltpu.CompilerParams(
            dimension_semantics=("parallel",)),
    )(x_flat, w_flat, bconv, w1, b1, w2p, b2p, masks)

    return out.reshape(N, channels, H, W)                      # free reshape


def _reference(x, w_conv, b_conv, w_fc1, b_fc1, w_fc2, b_fc2,
               *, channels, radix, cardinality):
    """Pure-JAX reference mirroring the PyTorch SplAtConv2d forward."""
    N = x.shape[0]
    G = cardinality * radix
    dn = jax.lax.conv_dimension_numbers(x.shape, w_conv.shape,
                                        ("NCHW", "OIHW", "NCHW"))
    y = jax.lax.conv_general_dilated(x, w_conv, (1, 1), ((1, 1), (1, 1)),
                                     dimension_numbers=dn,
                                     feature_group_count=G)
    y = jnp.maximum(y + b_conv.reshape(1, -1, 1, 1), 0.0)

    if radix > 1:
        splited = [y[:, r * channels:(r + 1) * channels] for r in range(radix)]
        gap = sum(splited)
    else:
        splited = [y]
        gap = y
    gap = jnp.mean(gap, axis=(2, 3), keepdims=True)

    def conv1x1(v, w, b, groups):
        dnn = jax.lax.conv_dimension_numbers(v.shape, w.shape,
                                             ("NCHW", "OIHW", "NCHW"))
        return jax.lax.conv_general_dilated(
            v, w, (1, 1), ((0, 0), (0, 0)), dimension_numbers=dnn,
            feature_group_count=groups) + b.reshape(1, -1, 1, 1)

    gap = jnp.maximum(conv1x1(gap, w_fc1, b_fc1, cardinality), 0.0)
    atten = conv1x1(gap, w_fc2, b_fc2, cardinality)

    a = atten.reshape(N, -1)
    if radix > 1:
        a = a.reshape(N, cardinality, radix, -1)
        a = jnp.transpose(a, (0, 2, 1, 3))
        a = jax.nn.softmax(a, axis=1)
        a = a.reshape(N, -1)
    else:
        a = jax.nn.sigmoid(a)
    a = a.reshape(N, -1, 1, 1)

    if radix > 1:
        attens = [a[:, r * channels:(r + 1) * channels] for r in range(radix)]
        out = sum(att * sp for att, sp in zip(attens, splited))
    else:
        out = a * y
    return out


if __name__ == "__main__":
    # Module-consistent small config: SplAtConv2d(in_channels=4, channels=8,
    # kernel_size=3, padding=1, groups=1, radix=2, reduction_factor=4).
    N, C_in, H, W = 2, 4, 16, 16
    channels, radix, cardinality, reduction_factor = 8, 2, 1, 4
    rchannel = channels * radix
    inter = max(C_in * radix // reduction_factor, 32)
    G = cardinality * radix

    key = jax.random.PRNGKey(0)
    ks = jax.random.split(key, 7)
    x = jax.random.normal(ks[0], (N, C_in, H, W), dtype=jnp.float32)
    w_conv = 0.1 * jax.random.normal(ks[1], (rchannel, C_in // G, 3, 3), jnp.float32)
    b_conv = 0.05 * jax.random.normal(ks[2], (rchannel,), jnp.float32)
    w_fc1 = 0.1 * jax.random.normal(ks[3], (inter, channels // cardinality, 1, 1), jnp.float32)
    b_fc1 = 0.05 * jax.random.normal(ks[4], (inter,), jnp.float32)
    w_fc2 = 0.1 * jax.random.normal(ks[5], (rchannel, inter // cardinality, 1, 1), jnp.float32)
    b_fc2 = 0.05 * jax.random.normal(ks[6], (rchannel,), jnp.float32)

    out = splat_conv2d(x, w_conv, b_conv, w_fc1, b_fc1, w_fc2, b_fc2,
                       channels=channels, radix=radix, cardinality=cardinality)
    out = jax.block_until_ready(out)

    ref = _reference(x, w_conv, b_conv, w_fc1, b_fc1, w_fc2, b_fc2,
                     channels=channels, radix=radix, cardinality=cardinality)
    ref = jax.block_until_ready(ref)

    assert out.shape == (N, channels, H, W)
    err = jnp.max(jnp.abs(out - ref))
    assert jnp.allclose(out, ref, atol=1e-4, rtol=1e-4), f"mismatch vs reference: {err}"

    print("KERNEL_OK")
</pallas_src>

<mosaic_0001>
module attributes {stable_mosaic.version = 11 : i64} {
  func.func @_splat_kernel(%arg0: i32, %arg1: memref<1x4x256xf32, #tpu.memory_space<vmem>>, %arg2: memref<16x36xf32, #tpu.memory_space<vmem>>, %arg3: memref<16x1xf32, #tpu.memory_space<vmem>>, %arg4: memref<32x8xf32, #tpu.memory_space<vmem>>, %arg5: memref<32x1xf32, #tpu.memory_space<vmem>>, %arg6: memref<16x32xf32, #tpu.memory_space<vmem>>, %arg7: memref<16x1xf32, #tpu.memory_space<vmem>>, %arg8: memref<2x256xf32, #tpu.memory_space<vmem>>, %arg9: memref<1x8x256xf32, #tpu.memory_space<vmem>>, %arg10: memref<4x512xf32, #tpu.memory_space<vmem>>, %arg11: memref<36x256xf32, #tpu.memory_space<vmem>>) attributes {dimension_semantics = [#tpu.dimension_semantics<parallel>], iteration_bounds = array<i64: 2>, scalar_prefetch = 0 : i64, scratch_operands = 2 : i64, tpu.core_type = #tpu.core_type<tc>, window_params = [{transform_indices = @transform_0, window_bounds = array<i64: 1, 4, 256>}, {pipeline_mode = #tpu.pipeline_mode<synchronous>, transform_indices = @transform_1, window_bounds = array<i64: 16, 36>}, {pipeline_mode = #tpu.pipeline_mode<synchronous>, transform_indices = @transform_2, window_bounds = array<i64: 16, 1>}, {pipeline_mode = #tpu.pipeline_mode<synchronous>, transform_indices = @transform_3, window_bounds = array<i64: 32, 8>}, {pipeline_mode = #tpu.pipeline_mode<synchronous>, transform_indices = @transform_4, window_bounds = array<i64: 32, 1>}, {pipeline_mode = #tpu.pipeline_mode<synchronous>, transform_indices = @transform_5, window_bounds = array<i64: 16, 32>}, {pipeline_mode = #tpu.pipeline_mode<synchronous>, transform_indices = @transform_6, window_bounds = array<i64: 16, 1>}, {pipeline_mode = #tpu.pipeline_mode<synchronous>, transform_indices = @transform_7, window_bounds = array<i64: 2, 256>}, {transform_indices = @transform_8, window_bounds = array<i64: 1, 8, 256>}]} {
    %cst = arith.constant 0.000000e+00 : f32
    %0 = vector.broadcast %cst : f32 to vector<4x128xf32>
    %c0 = arith.constant 0 : index
    %c0_0 = arith.constant 0 : index
    %1 = vector.load %arg10[%c0, %c0_0] : memref<4x512xf32, #tpu.memory_space<vmem>>, vector<4x128xf32>
    tpu.vector_store %arg10[%c0, %c0_0], %0 {strides = array<i32>} : memref<4x512xf32, #tpu.memory_space<vmem>>, vector<4x128xf32>,
    %cst_1 = arith.constant 0.000000e+00 : f32
    %2 = vector.broadcast %cst_1 : f32 to vector<4x128xf32>
    %c0_2 = arith.constant 0 : index
    %c384 = arith.constant 384 : index
    %3 = vector.load %arg10[%c0_2, %c384] : memref<4x512xf32, #tpu.memory_space<vmem>>, vector<4x128xf32>
    tpu.vector_store %arg10[%c0_2, %c384], %2 {strides = array<i32>} : memref<4x512xf32, #tpu.memory_space<vmem>>, vector<4x128xf32>,
    %c0_3 = arith.constant 0 : index
    %c0_4 = arith.constant 0 : index
    %c0_5 = arith.constant 0 : index
    %4 = vector.load %arg1[%c0_3, %c0_4, %c0_5] : memref<1x4x256xf32, #tpu.memory_space<vmem>>, vector<1x4x256xf32>
    %5 = vector.shape_cast %4 : vector<1x4x256xf32> to vector<4x256xf32>
    %c0_6 = arith.constant 0 : index
    %c128 = arith.constant 128 : index
    %6 = vector.load %arg10[%c0_6, %c128] : memref<4x512xf32, #tpu.memory_space<vmem>>, vector<4x256xf32>
    tpu.vector_store %arg10[%c0_6, %c128], %5 {strides = array<i32>} : memref<4x512xf32, #tpu.memory_space<vmem>>, vector<4x256xf32>,
    %c0_7 = arith.constant 0 : index
    %c111 = arith.constant 111 : index
    %7 = vector.load %arg10[%c0_7, %c111] : memref<4x512xf32, #tpu.memory_space<vmem>>, vector<4x256xf32>
    %c0_8 = arith.constant 0 : index
    %c0_9 = arith.constant 0 : index
    %8 = vector.load %arg8[%c0_8, %c0_9] : memref<2x256xf32, #tpu.memory_space<vmem>>, vector<1x256xf32>
    %9 = vector.broadcast %8 : vector<1x256xf32> to vector<4x256xf32>
    %10 = arith.mulf %7, %9 : vector<4x256xf32>
    %c0_10 = arith.constant 0 : index
    %c0_11 = arith.constant 0 : index
    %11 = vector.load %arg11[%c0_10, %c0_11] : memref<36x256xf32, #tpu.memory_space<vmem>>, vector<4x256xf32>
    tpu.vector_store %arg11[%c0_10, %c0_11], %10 {strides = array<i32>} : memref<36x256xf32, #tpu.memory_space<vmem>>, vector<4x256xf32>,
    %c0_12 = arith.constant 0 : index
    %c112 = arith.constant 112 : index
    %12 = vector.load %arg10[%c0_12, %c112] : memref<4x512xf32, #tpu.memory_space<vmem>>, vector<4x256xf32>
    %c4 = arith.constant 4 : index
    %c0_13 = arith.constant 0 : index
    %13 = vector.load %arg11[%c4, %c0_13] : memref<36x256xf32, #tpu.memory_space<vmem>>, vector<4x256xf32>
    tpu.vector_store %arg11[%c4, %c0_13], %12 {strides = array<i32>} : memref<36x256xf32, #tpu.memory_space<vmem>>, vector<4x256xf32>,
    %c0_14 = arith.constant 0 : index
    %c113 = arith.constant 113 : index
    %14 = vector.load %arg10[%c0_14, %c113] : memref<4x512xf32, #tpu.memory_space<vmem>>, vector<4x256xf32>
    %c1 = arith.constant 1 : index
    %c0_15 = arith.constant 0 : index
    %15 = vector.load %arg8[%c1, %c0_15] : memref<2x256xf32, #tpu.memory_space<vmem>>, vector<1x256xf32>
    %16 = vector.broadcast %15 : vector<1x256xf32> to vector<4x256xf32>
    %17 = arith.mulf %14, %16 : vector<4x256xf32>
    %c8 = arith.constant 8 : index
    %c0_16 = arith.constant 0 : index
    %18 = vector.load %arg11[%c8, %c0_16] : memref<36x256xf32, #tpu.memory_space<vmem>>, vector<4x256xf32>
    tpu.vector_store %arg11[%c8, %c0_16], %17 {strides = array<i32>} : memref<36x256xf32, #tpu.memory_space<vmem>>, vector<4x256xf32>,
    %c0_17 = arith.constant 0 : index
    %c127 = arith.constant 127 : index
    %19 = vector.load %arg10[%c0_17, %c127] : memref<4x512xf32, #tpu.memory_space<vmem>>, vector<4x256xf32>
    %c0_18 = arith.constant 0 : index
    %c0_19 = arith.constant 0 : index
    %20 = vector.load %arg8[%c0_18, %c0_19] : memref<2x256xf32, #tpu.memory_space<vmem>>, vector<1x256xf32>
    %21 = vector.broadcast %20 : vector<1x256xf32> to vector<4x256xf32>
    %22 = arith.mulf %19, %21 : vector<4x256xf32>
    %c12 = arith.constant 12 : index
    %c0_20 = arith.constant 0 : index
    %23 = vector.load %arg11[%c12, %c0_20] : memref<36x256xf32, #tpu.memory_space<vmem>>, vector<4x256xf32>
    tpu.vector_store %arg11[%c12, %c0_20], %22 {strides = array<i32>} : memref<36x256xf32, #tpu.memory_space<vmem>>, vector<4x256xf32>,
    %c0_21 = arith.constant 0 : index
    %c128_22 = arith.constant 128 : index
    %24 = vector.load %arg10[%c0_21, %c128_22] : memref<4x512xf32, #tpu.memory_space<vmem>>, vector<4x256xf32>
    %c16 = arith.constant 16 : index
    %c0_23 = arith.constant 0 : index
    %25 = vector.load %arg11[%c16, %c0_23] : memref<36x256xf32, #tpu.memory_space<vmem>>, vector<4x256xf32>
    tpu.vector_store %arg11[%c16, %c0_23], %24 {strides = array<i32>} : memref<36x256xf32, #tpu.memory_space<vmem>>, vector<4x256xf32>,
    %c0_24 = arith.constant 0 : index
    %c129 = arith.constant 129 : index
    %26 = vector.load %arg10[%c0_24, %c129] : memref<4x512xf32, #tpu.memory_space<vmem>>, vector<4x256xf32>
    %c1_25 = arith.constant 1 : index
    %c0_26 = arith.constant 0 : index
    %27 = vector.load %arg8[%c1_25, %c0_26] : memref<2x256xf32, #tpu.memory_space<vmem>>, vector<1x256xf32>
    %28 = vector.broadcast %27 : vector<1x256xf32> to vector<4x256xf32>
    %29 = arith.mulf %26, %28 : vector<4x256xf32>
    %c20 = arith.constant 20 : index
    %c0_27 = arith.constant 0 : index
    %30 = vector.load %arg11[%c20, %c0_27] : memref<36x256xf32, #tpu.memory_space<vmem>>, vector<4x256xf32>
    tpu.vector_store %arg11[%c20, %c0_27], %29 {strides = array<i32>} : memref<36x256xf32, #tpu.memory_space<vmem>>, vector<4x256xf32>,
    %c0_28 = arith.constant 0 : index
    %c143 = arith.constant 143 : index
    %31 = vector.load %arg10[%c0_28, %c143] : memref<4x512xf32, #tpu.memory_space<vmem>>, vector<4x256xf32>
    %c0_29 = arith.constant 0 : index
    %c0_30 = arith.constant 0 : index
    %32 = vector.load %arg8[%c0_29, %c0_30] : memref<2x256xf32, #tpu.memory_space<vmem>>, vector<1x256xf32>
    %33 = vector.broadcast %32 : vector<1x256xf32> to vector<4x256xf32>
    %34 = arith.mulf %31, %33 : vector<4x256xf32>
    %c24 = arith.constant 24 : index
    %c0_31 = arith.constant 0 : index
    %35 = vector.load %arg11[%c24, %c0_31] : memref<36x256xf32, #tpu.memory_space<vmem>>, vector<4x256xf32>
    tpu.vector_store %arg11[%c24, %c0_31], %34 {strides = array<i32>} : memref<36x256xf32, #tpu.memory_space<vmem>>, vector<4x256xf32>,
    %c0_32 = arith.constant 0 : index
    %c144 = arith.constant 144 : index
    %36 = vector.load %arg10[%c0_32, %c144] : memref<4x512xf32, #tpu.memory_space<vmem>>, vector<4x256xf32>
    %c28 = arith.constant 28 : index
    %c0_33 = arith.constant 0 : index
    %37 = vector.load %arg11[%c28, %c0_33] : memref<36x256xf32, #tpu.memory_space<vmem>>, vector<4x256xf32>
    tpu.vector_store %arg11[%c28, %c0_33], %36 {strides = array<i32>} : memref<36x256xf32, #tpu.memory_space<vmem>>, vector<4x256xf32>,
    %c0_34 = arith.constant 0 : index
    %c145 = arith.constant 145 : index
    %38 = vector.load %arg10[%c0_34, %c145] : memref<4x512xf32, #tpu.memory_space<vmem>>, vector<4x256xf32>
    %c1_35 = arith.constant 1 : index
    %c0_36 = arith.constant 0 : index
    %39 = vector.load %arg8[%c1_35, %c0_36] : memref<2x256xf32, #tpu.memory_space<vmem>>, vector<1x256xf32>
    %40 = vector.broadcast %39 : vector<1x256xf32> to vector<4x256xf32>
    %41 = arith.mulf %38, %40 : vector<4x256xf32>
    %c32 = arith.constant 32 : index
    %c0_37 = arith.constant 0 : index
    %42 = vector.load %arg11[%c32, %c0_37] : memref<36x256xf32, #tpu.memory_space<vmem>>, vector<4x256xf32>
    tpu.vector_store %arg11[%c32, %c0_37], %41 {strides = array<i32>} : memref<36x256xf32, #tpu.memory_space<vmem>>, vector<4x256xf32>,
    %c0_38 = arith.constant 0 : index
    %c0_39 = arith.constant 0 : index
    %43 = vector.load %arg2[%c0_38, %c0_39] : memref<16x36xf32, #tpu.memory_space<vmem>>, vector<16x36xf32>
    %c0_40 = arith.constant 0 : index
    %c0_41 = arith.constant 0 : index
    %44 = vector.load %arg11[%c0_40, %c0_41] : memref<36x256xf32, #tpu.memory_space<vmem>>, vector<36x256xf32>
    %cst_42 = arith.constant dense<0.000000e+00> : vector<16x256xf32>
    %45 = tpu.matmul %43, %44, %cst_42 {dimension_numbers = #tpu.dot_dimension_numbers<[1], [0], [0], [1], [0, 0, 1, 1], [], []>} : vector<16x36xf32>, vector<36x256xf32>, vector<16x256xf32> -> vector<16x256xf32>
    %c0_43 = arith.constant 0 : index
    %c0_44 = arith.constant 0 : index
    %46 = vector.load %arg3[%c0_43, %c0_44] : memref<16x1xf32, #tpu.memory_space<vmem>>, vector<16x1xf32>
    %47 = vector.broadcast %46 : vector<16x1xf32> to vector<16x256xf32>
    %48 = arith.addf %45, %47 : vector<16x256xf32>
    %cst_45 = arith.constant 0.000000e+00 : f32
    %49 = vector.broadcast %cst_45 : f32 to vector<16x256xf32>
    %50 = arith.maximumf %48, %49 : vector<16x256xf32>
    %51 = vector.extract_strided_slice %50 {offsets = [0, 0], sizes = [8, 256], strides = [1, 1]} : vector<16x256xf32> to vector<8x256xf32>
    %52 = vector.extract_strided_slice %50 {offsets = [8, 0], sizes = [8, 256], strides = [1, 1]} : vector<16x256xf32> to vector<8x256xf32>
    %53 = arith.addf %51, %52 : vector<8x256xf32>
    %cst_46 = arith.constant dense<0.000000e+00> : vector<8xf32>
    %54 = vector.multi_reduction <add>, %53, %cst_46 [1] : vector<8x256xf32> to vector<8xf32>
    %55 = vector.shape_cast %54 : vector<8xf32> to vector<8x1xf32>
    %cst_47 = arith.constant 3.906250e-03 : f32
    %56 = vector.broadcast %cst_47 : f32 to vector<8x1xf32>
    %57 = arith.mulf %55, %56 : vector<8x1xf32>
    %c0_48 = arith.constant 0 : index
    %c0_49 = arith.constant 0 : index
    %58 = vector.load %arg4[%c0_48, %c0_49] : memref<32x8xf32, #tpu.memory_space<vmem>>, vector<32x8xf32>
    %cst_50 = arith.constant dense<0.000000e+00> : vector<32x1xf32>
    %59 = tpu.matmul %58, %57, %cst_50 {dimension_numbers = #tpu.dot_dimension_numbers<[1], [0], [0], [1], [0, 0, 1, 1], [], []>} : vector<32x8xf32>, vector<8x1xf32>, vector<32x1xf32> -> vector<32x1xf32>
    %c0_51 = arith.constant 0 : index
    %c0_52 = arith.constant 0 : index
    %60 = vector.load %arg5[%c0_51, %c0_52] : memref<32x1xf32, #tpu.memory_space<vmem>>, vector<32x1xf32>
    %61 = arith.addf %59, %60 : vector<32x1xf32>
    %cst_53 = arith.constant 0.000000e+00 : f32
    %62 = vector.broadcast %cst_53 : f32 to vector<32x1xf32>
    %63 = arith.maximumf %61, %62 : vector<32x1xf32>
    %c0_54 = arith.constant 0 : index
    %c0_55 = arith.constant 0 : index
    %64 = vector.load %arg6[%c0_54, %c0_55] : memref<16x32xf32, #tpu.memory_space<vmem>>, vector<16x32xf32>
    %cst_56 = arith.constant dense<0.000000e+00> : vector<16x1xf32>
    %65 = tpu.matmul %64, %63, %cst_56 {dimension_numbers = #tpu.dot_dimension_numbers<[1], [0], [0], [1], [0, 0, 1, 1], [], []>} : vector<16x32xf32>, vector<32x1xf32>, vector<16x1xf32> -> vector<16x1xf32>
    %c0_57 = arith.constant 0 : index
    %c0_58 = arith.constant 0 : index
    %66 = vector.load %arg7[%c0_57, %c0_58] : memref<16x1xf32, #tpu.memory_space<vmem>>, vector<16x1xf32>
    %67 = arith.addf %65, %66 : vector<16x1xf32>
    %68 = vector.extract_strided_slice %67 {offsets = [0, 0], sizes = [8, 1], strides = [1, 1]} : vector<16x1xf32> to vector<8x1xf32>
    %69 = vector.extract_strided_slice %67 {offsets = [8, 0], sizes = [8, 1], strides = [1, 1]} : vector<16x1xf32> to vector<8x1xf32>
    %70 = arith.maximumf %68, %69 : vector<8x1xf32>
    %71 = arith.subf %68, %70 : vector<8x1xf32>
    %72 = math.exp %71 : vector<8x1xf32>
    %73 = arith.subf %69, %70 : vector<8x1xf32>
    %74 = math.exp %73 : vector<8x1xf32>
    %75 = arith.addf %72, %74 : vector<8x1xf32>
    %76 = arith.divf %72, %75 : vector<8x1xf32>
    %77 = arith.divf %74, %75 : vector<8x1xf32>
    %78 = vector.extract_strided_slice %50 {offsets = [0, 0], sizes = [8, 256], strides = [1, 1]} : vector<16x256xf32> to vector<8x256xf32>
    %79 = vector.broadcast %76 : vector<8x1xf32> to vector<8x256xf32>
    %80 = arith.mulf %79, %78 : vector<8x256xf32>
    %81 = vector.extract_strided_slice %50 {offsets = [8, 0], sizes = [8, 256], strides = [1, 1]} : vector<16x256xf32> to vector<8x256xf32>
    %82 = vector.broadcast %77 : vector<8x1xf32> to vector<8x256xf32>
    %83 = arith.mulf %82, %81 : vector<8x256xf32>
    %84 = arith.addf %80, %83 : vector<8x256xf32>
    %c0_59 = arith.constant 0 : index
    %c0_60 = arith.constant 0 : index
    %c0_61 = arith.constant 0 : index
    %85 = vector.load %arg9[%c0_59, %c0_60, %c0_61] : memref<1x8x256xf32, #tpu.memory_space<vmem>>, vector<1x8x256xf32>
    %86 = vector.shape_cast %85 : vector<1x8x256xf32> to vector<8x256xf32>
    %87 = vector.shape_cast %84 : vector<8x256xf32> to vector<1x8x256xf32>
    tpu.vector_store %arg9[%c0_59, %c0_60, %c0_61], %87 {strides = array<i32>} : memref<1x8x256xf32, #tpu.memory_space<vmem>>, vector<1x8x256xf32>,
    return
  }
  func.func @transform_0(%arg0: i32) -> (i32, i32, i32) {
    %c0_i32 = arith.constant 0 : i32
    %c0_i32_0 = arith.constant 0 : i32
    %c0_i32_1 = arith.constant 0 : i32
    return %arg0, %c0_i32, %c0_i32_0 : i32, i32, i32
  }
  func.func @transform_1(%arg0: i32) -> (i32, i32) {
    %c0_i32 = arith.constant 0 : i32
    %c0_i32_0 = arith.constant 0 : i32
    %c0_i32_1 = arith.constant 0 : i32
    return %c0_i32, %c0_i32_0 : i32, i32
  }
  func.func @transform_2(%arg0: i32) -> (i32, i32) {
    %c0_i32 = arith.constant 0 : i32
    %c0_i32_0 = arith.constant 0 : i32
    %c0_i32_1 = arith.constant 0 : i32
    return %c0_i32, %c0_i32_0 : i32, i32
  }
  func.func @transform_3(%arg0: i32) -> (i32, i32) {
    %c0_i32 = arith.constant 0 : i32
    %c0_i32_0 = arith.constant 0 : i32
    %c0_i32_1 = arith.constant 0 : i32
    return %c0_i32, %c0_i32_0 : i32, i32
  }
  func.func @transform_4(%arg0: i32) -> (i32, i32) {
    %c0_i32 = arith.constant 0 : i32
    %c0_i32_0 = arith.constant 0 : i32
    %c0_i32_1 = arith.constant 0 : i32
    return %c0_i32, %c0_i32_0 : i32, i32
  }
  func.func @transform_5(%arg0: i32) -> (i32, i32) {
    %c0_i32 = arith.constant 0 : i32
    %c0_i32_0 = arith.constant 0 : i32
    %c0_i32_1 = arith.constant 0 : i32
    return %c0_i32, %c0_i32_0 : i32, i32
  }
  func.func @transform_6(%arg0: i32) -> (i32, i32) {
    %c0_i32 = arith.constant 0 : i32
    %c0_i32_0 = arith.constant 0 : i32
    %c0_i32_1 = arith.constant 0 : i32
    return %c0_i32, %c0_i32_0 : i32, i32
  }
  func.func @transform_7(%arg0: i32) -> (i32, i32) {
    %c0_i32 = arith.constant 0 : i32
    %c0_i32_0 = arith.constant 0 : i32
    %c0_i32_1 = arith.constant 0 : i32
    return %c0_i32, %c0_i32_0 : i32, i32
  }
  func.func @transform_8(%arg0: i32) -> (i32, i32, i32) {
    %c0_i32 = arith.constant 0 : i32
    %c0_i32_0 = arith.constant 0 : i32
    %c0_i32_1 = arith.constant 0 : i32
    return %arg0, %c0_i32, %c0_i32_0 : i32, i32, i32
  }
}

</mosaic_0001>

<llo_original>
// kernel: tpu_custom_call.1
$region0: #{tpu_custom_call.1}
  #allocation0 [shape = 'u32[]', space=smem, size = 0x4, offset = 0x4, fixed_abs, tag = 'smem constant byte address 0x4 - core index']
  #allocation1 [shape = 'u32[144,128]{1,0:T(1,128)}', space=vmem, size = 0x12000, scoped, tag = 'internal scratch']
  #allocation2 [shape = 'f32[4,512]{1,0:T(4,128)}', space=vmem, size = 0x2000, scoped, tag = 'scratch operand']
  #allocation3 [shape = 'f32[36,256]{1,0:T(8,128)}', space=vmem, size = 0xa000, scoped, tag = 'scratch operand']
  %s0 = inlined_call_operand.vmem [shape: f32[2,4,256], index: 0, kind: input, shape index: {}]
  %s1 = inlined_call_operand.vmem [shape: f32[16,36], index: 1, kind: input, shape index: {}]
  %s2 = inlined_call_operand.vmem [shape: f32[16,1], index: 2, kind: input, shape index: {}]
  %s3 = inlined_call_operand.vmem [shape: f32[32,8], index: 3, kind: input, shape index: {}]
  %s4 = inlined_call_operand.vmem [shape: f32[32,1], index: 4, kind: input, shape index: {}]
  %s5 = inlined_call_operand.vmem [shape: f32[16,32], index: 5, kind: input, shape index: {}]
  %s6 = inlined_call_operand.vmem [shape: f32[16,1], index: 6, kind: input, shape index: {}]
  %s7 = inlined_call_operand.vmem [shape: f32[2,256], index: 7, kind: input, shape index: {}]
  %s8 = inlined_call_operand.hbm [shape: f32[2,8,256], index: 8, kind: output, shape index: {}]
  %s9 = sld [smem:[#allocation0]]
  $region65: #{tpu_custom_call.1} parent=0
    _
  %s11 = ssub.s32 1, %s9
  %s12 = scalar_select 0, %s11, %s9
  $region1: #{tpu_custom_call.1} parent=0
    #allocation4 [shape = 'u8[16384]{0}', space=vmem, size = 0x4000, scoped, tag = 'output window, operand 0']
    #allocation5 [shape = 's32[2]{0}', space=sflag, size = 0x8, scoped, tag = 'scoped memory for tpu_custom_call.1']
    %13 = vsyncpa [#allocation5], 0
    %s14 = scalar_lea.sflag [#allocation5], 1
    %15 = vsyncpa %s14, 0
    loop: start=0, step=1, limit=4
    $region2: #{tpu_custom_call.1} parent=1 // loop_pre_header
      _
    $region3: #{tpu_custom_call.1} parent=1 // loop_header
      %s17 = sphi 0, %s21
      %p18 = scmp.ge.s32.totalorder %s17, 4
      %s27 = sphi 0, %s29
      %s30 = sphi 0, %s27
      %s31 = sphi 0, %s30
      %s47 = sphi 0, %s31
      %s51 = sphi 0, %s51
      %s53 = sphi 0, %s51
      %s54 = sphi 0, %s53
      %s68 = sphi 0, %s54
      %s72 = sphi 0, %s72
      %s74 = sphi 0, %s72
      %s75 = sphi 0, %s74
      %s89 = sphi 0, %s75
      %s93 = sphi 0, %s93
      %s95 = sphi 0, %s93
      %s96 = sphi 0, %s95
      %s110 = sphi 0, %s96
      %s114 = sphi 0, %s114
      %s116 = sphi 0, %s114
      %s117 = sphi 0, %s116
      %s131 = sphi 0, %s117
      %s135 = sphi 0, %s135
      %s137 = sphi 0, %s135
      %s138 = sphi 0, %s137
      %s152 = sphi 0, %s138
      %s156 = sphi 0, %s156
      %s158 = sphi 0, %s156
      %s159 = sphi 0, %s158
      %s173 = sphi 0, %s159
      %s177 = sphi 0, %s177
      %s179 = sphi 0, %s177
      %s180 = sphi 0, %s179
      %s194 = sphi 0, %s180
      %s200 = sphi 0, %s202
      %s203 = sphi 0, %s200
      %s204 = sphi 0, %s203
      %s220 = sphi 0, %s204
    $region4: #{tpu_custom_call.1} parent=1 // loop_header_branch
      %20 = sbr.rel (%p18) target = $region8
    $region5: #{tpu_custom_call.1} parent=1 // loop_body
      %s22 = ssub.s32 %s17, 1
      %s23 = ssub.s32 %s17, 2
      %s24 = sadd.s32 %s17, 1
      %s25 = ssub.s32 %s17, %s24
      %p26 = scmp.eq.s32.totalorder %s25, 0
      %s28 = sadd.s32 %s27, 1
      %s29 = scalar_select %p26, %s27, %s28
      %p32 = pneg %p26
      %p33 = scmp.eq.s32.totalorder %s17, 1
      %p34 = por %p32, %p33
      %p35 = scmp.ne.s32.totalorder %s27, %s30
      %p36 = scmp.eq.s32.totalorder %s17, 0
      %p37 = por %p35, %p36
      %p38 = scmp.ne.s32.totalorder %s27, %s30
      %p39 = scmp.eq.s32.totalorder %s22, 1
      %p40 = por %p38, %p39
      %p41 = scmp.ne.s32.totalorder %s30, %s31
      %p42 = scmp.eq.s32.totalorder %s22, 0
      %p43 = por %p41, %p42
      %p44 = scmp.ne.s32.totalorder %s30, %s31
      %p45 = scmp.eq.s32.totalorder %s23, 1
      %p46 = por %p44, %p45
      %p48 = scmp.ne.s32.totalorder %s31, %s47
      %p49 = scmp.eq.s32.totalorder %s23, 0
      %p50 = por %p48, %p49
      %s52 = sadd.s32 %s51, 1
      %p55 = scmp.eq.s32.totalorder %s17, 1
      %p56 = scmp.ne.s32.totalorder %s51, %s53
      %p57 = scmp.eq.s32.totalorder %s17, 0
      %p58 = por %p56, %p57
      %p59 = scmp.ne.s32.totalorder %s51, %s53
      %p60 = scmp.eq.s32.totalorder %s22, 1
      %p61 = por %p59, %p60
      %p62 = scmp.ne.s32.totalorder %s53, %s54
      %p63 = scmp.eq.s32.totalorder %s22, 0
      %p64 = por %p62, %p63
      %p65 = scmp.ne.s32.totalorder %s53, %s54
      %p66 = scmp.eq.s32.totalorder %s23, 1
      %p67 = por %p65, %p66
      %p69 = scmp.ne.s32.totalorder %s54, %s68
      %p70 = scmp.eq.s32.totalorder %s23, 0
      %p71 = por %p69, %p70
      %s73 = sadd.s32 %s72, 1
      %p76 = scmp.eq.s32.totalorder %s17, 1
      %p77 = scmp.ne.s32.totalorder %s72, %s74
      %p78 = scmp.eq.s32.totalorder %s17, 0
      %p79 = por %p77, %p78
      %p80 = scmp.ne.s32.totalorder %s72, %s74
      %p81 = scmp.eq.s32.totalorder %s22, 1
      %p82 = por %p80, %p81
      %p83 = scmp.ne.s32.totalorder %s74, %s75
      %p84 = scmp.eq.s32.totalorder %s22, 0
      %p85 = por %p83, %p84
      %p86 = scmp.ne.s32.totalorder %s74, %s75
      %p87 = scmp.eq.s32.totalorder %s23, 1
      %p88 = por %p86, %p87
      %p90 = scmp.ne.s32.totalorder %s75, %s89
      %p91 = scmp.eq.s32.totalorder %s23, 0
      %p92 = por %p90, %p91
      %s94 = sadd.s32 %s93, 1
      %p97 = scmp.eq.s32.totalorder %s17, 1
      %p98 = scmp.ne.s32.totalorder %s93, %s95
      %p99 = scmp.eq.s32.totalorder %s17, 0
      %p100 = por %p98, %p99
      %p101 = scmp.ne.s32.totalorder %s93, %s95
      %p102 = scmp.eq.s32.totalorder %s22, 1
      %p103 = por %p101, %p102
      %p104 = scmp.ne.s32.totalorder %s95, %s96
      %p105 = scmp.eq.s32.totalorder %s22, 0
      %p106 = por %p104, %p105
      %p107 = scmp.ne.s32.totalorder %s95, %s96
      %p108 = scmp.eq.s32.totalorder %s23, 1
      %p109 = por %p107, %p108
      %p111 = scmp.ne.s32.totalorder %s96, %s110
      %p112 = scmp.eq.s32.totalorder %s23, 0
      %p113 = por %p111, %p112
      %s115 = sadd.s32 %s114, 1
      %p118 = scmp.eq.s32.totalorder %s17, 1
      %p119 = scmp.ne.s32.totalorder %s114, %s116
      %p120 = scmp.eq.s32.totalorder %s17, 0
      %p121 = por %p119, %p120
      %p122 = scmp.ne.s32.totalorder %s114, %s116
      %p123 = scmp.eq.s32.totalorder %s22, 1
      %p124 = por %p122, %p123
      %p125 = scmp.ne.s32.totalorder %s116, %s117
      %p126 = scmp.eq.s32.totalorder %s22, 0
      %p127 = por %p125, %p126
      %p128 = scmp.ne.s32.totalorder %s116, %s117
      %p129 = scmp.eq.s32.totalorder %s23, 1
      %p130 = por %p128, %p129
      %p132 = scmp.ne.s32.totalorder %s117, %s131
      %p133 = scmp.eq.s32.totalorder %s23, 0
      %p134 = por %p132, %p133
      %s136 = sadd.s32 %s135, 1
      %p139 = scmp.eq.s32.totalorder %s17, 1
      %p140 = scmp.ne.s32.totalorder %s135, %s137
      %p141 = scmp.eq.s32.totalorder %s17, 0
      %p142 = por %p140, %p141
      %p143 = scmp.ne.s32.totalorder %s135, %s137
      %p144 = scmp.eq.s32.totalorder %s22, 1
      %p145 = por %p143, %p144
      %p146 = scmp.ne.s32.totalorder %s137, %s138
      %p147 = scmp.eq.s32.totalorder %s22, 0
      %p148 = por %p146, %p147
      %p149 = scmp.ne.s32.totalorder %s137, %s138
      %p150 = scmp.eq.s32.totalorder %s23, 1
      %p151 = por %p149, %p150
      %p153 = scmp.ne.s32.totalorder %s138, %s152
      %p154 = scmp.eq.s32.totalorder %s23, 0
      %p155 = por %p153, %p154
      %s157 = sadd.s32 %s156, 1
      %p160 = scmp.eq.s32.totalorder %s17, 1
      %p161 = scmp.ne.s32.totalorder %s156, %s158
      %p162 = scmp.eq.s32.totalorder %s17, 0
      %p163 = por %p161, %p162
      %p164 = scmp.ne.s32.totalorder %s156, %s158
      %p165 = scmp.eq.s32.totalorder %s22, 1
      %p166 = por %p164, %p165
      %p167 = scmp.ne.s32.totalorder %s158, %s159
      %p168 = scmp.eq.s32.totalorder %s22, 0
      %p169 = por %p167, %p168
      %p170 = scmp.ne.s32.totalorder %s158, %s159
      %p171 = scmp.eq.s32.totalorder %s23, 1
      %p172 = por %p170, %p171
      %p174 = scmp.ne.s32.totalorder %s159, %s173
      %p175 = scmp.eq.s32.totalorder %s23, 0
      %p176 = por %p174, %p175
      %s178 = sadd.s32 %s177, 1
      %p181 = scmp.eq.s32.totalorder %s17, 1
      %p182 = scmp.ne.s32.totalorder %s177, %s179
      %p183 = scmp.eq.s32.totalorder %s17, 0
      %p184 = por %p182, %p183
      %p185 = scmp.ne.s32.totalorder %s177, %s179
      %p186 = scmp.eq.s32.totalorder %s22, 1
      %p187 = por %p185, %p186
      %p188 = scmp.ne.s32.totalorder %s179, %s180
      %p189 = scmp.eq.s32.totalorder %s22, 0
      %p190 = por %p188, %p189
      %p191 = scmp.ne.s32.totalorder %s179, %s180
      %p192 = scmp.eq.s32.totalorder %s23, 1
      %p193 = por %p191, %p192
      %p195 = scmp.ne.s32.totalorder %s180, %s194
      %p196 = scmp.eq.s32.totalorder %s23, 0
      %p197 = por %p195, %p196
      %s198 = ssub.s32 %s17, %s24
      %p199 = scmp.eq.s32.totalorder %s198, 0
      %s201 = sadd.s32 %s200, 1
      %s202 = scalar_select %p199, %s200, %s201
      %p205 = pneg %p199
      %p206 = scmp.eq.s32.totalorder %s17, 1
      %p207 = por %p205, %p206
      %p208 = scmp.ne.s32.totalorder %s200, %s203
      %p209 = scmp.eq.s32.totalorder %s17, 0
      %p210 = por %p208, %p209
      %p211 = scmp.ne.s32.totalorder %s200, %s203
      %p212 = scmp.eq.s32.totalorder %s22, 1
      %p213 = por %p211, %p212
      %p214 = scmp.ne.s32.totalorder %s203, %s204
      %p215 = scmp.eq.s32.totalorder %s22, 0
      %p216 = por %p214, %p215
      %p217 = scmp.ne.s32.totalorder %s203, %s204
      %p218 = scmp.eq.s32.totalorder %s23, 1
      %p219 = por %p217, %p218
      %p221 = scmp.ne.s32.totalorder %s204, %s220
      %p222 = scmp.eq.s32.totalorder %s23, 0
      %p223 = por %p221, %p222
      %p224 = scmp.le.s32.totalorder 1, %s17
      %p225 = scmp.lt.s32.totalorder %s17, 3
      %p226 = pnand %p224, %p225
      %p227 = pneg %p226
      // Predicated region
      $region9: #{tpu_custom_call.1} parent=5 // pred_check
        _
      $region10: #{tpu_custom_call.1} parent=5 // pred_check_branch
        %229 = sbr.rel (%p226) target = $region12
      $region11: #{tpu_custom_call.1} parent=5 // pred_region
        %s230 = ssub.s32 %s17, 1
        // Predicated region
        $region13: #{tpu_custom_call.1} parent=11 // pred_check
          %p231 = pneg %p64
        $region14: #{tpu_custom_call.1} parent=11 // pred_check_branch
          %233 = sbr.rel (%p231) target = $region16
        $region15: #{tpu_custom_call.1} parent=11 // pred_region
          _
        $region16: #{tpu_custom_call.1} parent=11 // pred_fallthru
          _
        // Predicated region
        $region17: #{tpu_custom_call.1} parent=11 // pred_check
          %p234 = pneg %p85
        $region18: #{tpu_custom_call.1} parent=11 // pred_check_branch
          %236 = sbr.rel (%p234) target = $region20
        $region19: #{tpu_custom_call.1} parent=11 // pred_region
          _
        $region20: #{tpu_custom_call.1} parent=11 // pred_fallthru
          _
        // Predicated region
        $region21: #{tpu_custom_call.1} parent=11 // pred_check
          %p237 = pneg %p106
        $region22: #{tpu_custom_call.1} parent=11 // pred_check_branch
          %239 = sbr.rel (%p237) target = $region24
        $region23: #{tpu_custom_call.1} parent=11 // pred_region
          _
        $region24: #{tpu_custom_call.1} parent=11 // pred_fallthru
          _
        // Predicated region
        $region25: #{tpu_custom_call.1} parent=11 // pred_check
          %p240 = pneg %p127
        $region26: #{tpu_custom_call.1} parent=11 // pred_check_branch
          %242 = sbr.rel (%p240) target = $region28
        $region27: #{tpu_custom_call.1} parent=11 // pred_region
          _
        $region28: #{tpu_custom_call.1} parent=11 // pred_fallthru
          _
        // Predicated region
        $region29: #{tpu_custom_call.1} parent=11 // pred_check
          %p243 = pneg %p148
        $region30: #{tpu_custom_call.1} parent=11 // pred_check_branch
          %245 = sbr.rel (%p243) target = $region32
        $region31: #{tpu_custom_call.1} parent=11 // pred_region
          _
        $region32: #{tpu_custom_call.1} parent=11 // pred_fallthru
          _
        // Predicated region
        $region33: #{tpu_custom_call.1} parent=11 // pred_check
          %p246 = pneg %p169
        $region34: #{tpu_custom_call.1} parent=11 // pred_check_branch
          %248 = sbr.rel (%p246) target = $region36
        $region35: #{tpu_custom_call.1} parent=11 // pred_region
          _
        $region36: #{tpu_custom_call.1} parent=11 // pred_fallthru
          _
        // Predicated region
        $region37: #{tpu_custom_call.1} parent=11 // pred_check
          %p249 = pneg %p190
        $region38: #{tpu_custom_call.1} parent=11 // pred_check_branch
          %251 = sbr.rel (%p249) target = $region40
        $region39: #{tpu_custom_call.1} parent=11 // pred_region
          _
        $region40: #{tpu_custom_call.1} parent=11 // pred_fallthru
          _
      $region12: #{tpu_custom_call.1} parent=5 // pred_fallthru
        _
      %p252 = scmp.lt.s32.totalorder %s17, 2
      // Predicated region
      $region41: #{tpu_custom_call.1} parent=5 // pred_check
        %p253 = pneg %p252
      $region42: #{tpu_custom_call.1} parent=5 // pred_check_branch
        %255 = sbr.rel (%p253) target = $region44
      $region43: #{tpu_custom_call.1} parent=5 // pred_region
        // Predicated region
        $region45: #{tpu_custom_call.1} parent=43 // pred_check
          %p256 = pneg %p37
        $region46: #{tpu_custom_call.1} parent=43 // pred_check_branch
          %258 = sbr.rel (%p256) target = $region48
        $region47: #{tpu_custom_call.1} parent=43 // pred_region
          %p259 = scmp.lt.s32.totalorder %s17, 1
          %s260 = scalar_select %p259, %s17, 1
          %s261 = smul.addr %s260, 2
          %s262 = smul.addr %s261, 4
          %s263 = scalar_lea.vmem %s0, %s262
        $region48: #{tpu_custom_call.1} parent=43 // pred_fallthru
          _
      $region44: #{tpu_custom_call.1} parent=5 // pred_fallthru
        _
      %p264 = scmp.le.s32.totalorder 1, %s17
      %p265 = scmp.lt.s32.totalorder %s17, 3
      %p266 = pnand %p264, %p265
      %p267 = pneg %p266
      // Predicated region
      $region49: #{tpu_custom_call.1} parent=5 // pred_check
        _
      $region50: #{tpu_custom_call.1} parent=5 // pred_check_branch
        %269 = sbr.rel (%p266) target = $region52
      $region51: #{tpu_custom_call.1} parent=5 // pred_region
        %s270 = ssub.s32 %s17, 1
        %p271 = scmp.lt.s32.totalorder %s22, 1
        %s272 = scalar_select %p271, %s22, 1
        %s273 = smul.addr %s272, 2
        %s274 = smul.addr %s273, 4
        %s275 = scalar_lea.vmem %s0, %s274
        %p276 = pneg %p43
        %p277 = pneg %p40
        %p278 = pneg %p64
        %p279 = pneg %p61
        %p280 = pneg %p85
        %p281 = pneg %p82
        %p282 = pneg %p106
        %p283 = pneg %p103
        %p284 = pneg %p127
        %p285 = pneg %p124
        %p286 = pneg %p148
        %p287 = pneg %p145
        %p288 = pneg %p169
        %p289 = pneg %p166
        %p290 = pneg %p190
        %p291 = pneg %p187
        %p292 = pneg %p216
        %p293 = pneg %p213
        %s294 = sand.u32 %s203, 1
        %s295 = scalar_lea.sflag [#allocation5], %s294
        %s296 = sand.u32 %s203, 1
        %s297 = smul.addr %s296, 16
        %s298 = scalar_lea.vmem [#allocation4], %s297
        %p299 = scmp.lt.s32.totalorder %s22, 1
        %s300 = scalar_select %p299, %s22, 1
        %s301 = smul.addr %s300, 2
        %s302 = smul.addr %s301, 4
        %s303 = scalar_lea.vmem %s0, %s302
        %304 = vst [vmem:[#allocation2] sm:$0xf] 0.0
        %305 = vst [vmem:[#allocation2 + $0xc] sm:$0xf] 0.0
        %v306 = vld [vmem:[%s303] sm:$0xff]
        %307 = vst [vmem:[#allocation2 + $0x4] sm:$0xff] %v306
        %v308 = vld [vmem:[#allocation2] sm:$0xff]
        %v309 = vld [vmem:[#allocation2 + $0x8] sm:$0xf]
        %v310 = vld [vmem:[%s7] ss:$2 sm:$0x3]
        %v312 = vlaneseq
        %v313 = vshrl.u32 %v312, 7
        %v314 = vsub.s32 0, %v313
        %v315 = vrot.slane %v310, %v314
        %v316 = vlaneseq
        %v317 = vshrl.u32 %v316, 7
        %v318 = vsub.s32 1, %v317
        %v319 = vrot.slane %v310, %v318
        %v320 = vcombine.low %v315, %v319
        %321 = vrot.lane.b32.xlu0 %v320, 111
        %v322 = vpop.permute.xlu0 %321
        %v323 = vrot.slane %v322, 4
        %vm324 = vcmask 908288
        %v325 = vsel %vm324, %v323, %v322
        %v328 = vmul.f32 %v308, %v325
        %v329 = vmul.f32 %v309, %v323
        %v332 = vcombine.high %v328, %v328
        %333 = vrot.lane.b32.xlu0 %v328, 17
        %v334 = vpop.permute.xlu0 %333
        %335 = vrot.lane.b32.xlu0 %v332, 17
        %v336 = vpop.permute.xlu0 %335
        %337 = vrot.lane.b32.xlu0 %v329, 17
        %v338 = vpop.permute.xlu0 %337
        %vm339 = vcmask 138240
        %v340 = vsel %vm339, %v334, %v336
        %v341 = vsel %vm339, %v336, %v338
        %344 = vst [vmem:[#allocation3] sm:$0xf] %v340
        %345 = vst [vmem:[#allocation3 + $0x8] sm:$0xf] %v341
        %v346 = vld [vmem:[#allocation2] sm:$0xff]
        %v347 = vld [vmem:[#allocation2 + $0x8] sm:$0xf]
        %v350 = vcombine.low %v346, %v346
        %v351 = vcombine.low %v347, %v347
        %352 = vrot.lane.b32.xlu0 %v350, 16
        %v353 = vpop.permute.xlu0 %352
        %354 = vrot.lane.b32.xlu0 %v346, 16
        %v355 = vpop.permute.xlu0 %354
        %356 = vrot.lane.b32.xlu0 %v351, 16
        %v357 = vpop.permute.xlu0 %356
        %vm358 = vcmask 130048
        %v359 = vsel %vm358, %v353, %v355
        %v360 = vsel %vm358, %v355, %v357
        %363 = vst [vmem:[#allocation3] sm:$0xf0] %v359
        %364 = vst [vmem:[#allocation3 + $0x8] sm:$0xf0] %v360
        %v365 = vld [vmem:[#allocation2] sm:$0xff]
        %v366 = vld [vmem:[#allocation2 + $0x8] sm:$0xf]
        %s367 = scalar_lea.vmem %s7, 1
        %v368 = vld [vmem:[%s367] ss:$2 sm:$0x3]
        %v370 = vlaneseq
        %v371 = vshrl.u32 %v370, 7
        %v372 = vsub.s32 0, %v371
        %v373 = vrot.slane %v368, %v372
        %v374 = vlaneseq
        %v375 = vshrl.u32 %v374, 7
        %v376 = vsub.s32 1, %v375
        %v377 = vrot.slane %v368, %v376
        %v378 = vcombine.low %v373, %v377
        %379 = vrot.lane.b32.xlu0 %v378, 113
        %v380 = vpop.permute.xlu0 %379
        %v381 = vrot.slane %v380, 4
        %vm382 = vcmask 924672
        %v383 = vsel %vm382, %v381, %v380
        %v386 = vmul.f32 %v365, %v383
        %v387 = vmul.f32 %v366, %v381
        %v390 = vcombine.high %v386, %v386
        %391 = vrot.lane.b32.xlu0 %v386, 15
        %v392 = vpop.permute.xlu0 %391
        %393 = vrot.lane.b32.xlu0 %v390, 15
        %v394 = vpop.permute.xlu0 %393
        %395 = vrot.lane.b32.xlu0 %v387, 15
        %v396 = vpop.permute.xlu0 %395
        %vm397 = vcmask 121856
        %v398 = vsel %vm397, %v392, %v394
        %v399 = vsel %vm397, %v394, %v396
        %402 = vst [vmem:[#allocation3 + $0x10] sm:$0xf] %v398
        %403 = vst [vmem:[#allocation3 + $0x18] sm:$0xf] %v399
        %v404 = vld [vmem:[#allocation2] sm:$0xff]
        %v405 = vld [vmem:[#allocation2 + $0x8] sm:$0xf]
        %v406 = vld [vmem:[%s7] ss:$2 sm:$0x3]
        %v408 = vlaneseq
        %v409 = vshrl.u32 %v408, 7
        %v410 = vsub.s32 0, %v409
        %v411 = vrot.slane %v406, %v410
        %v412 = vlaneseq
        %v413 = vshrl.u32 %v412, 7
        %v414 = vsub.s32 1, %v413
        %v415 = vrot.slane %v406, %v414
        %v416 = vcombine.low %v411, %v415
        %417 = vrot.lane.b32.xlu0 %v416, 127
        %v418 = vpop.permute.xlu0 %417
        %v419 = vrot.slane %v418, 4
        %vm420 = vcmask 1039360
        %v421 = vsel %vm420, %v419, %v418
        %v424 = vmul.f32 %v404, %v421
        %v425 = vmul.f32 %v405, %v419
        %v428 = vcombine.low %v424, %v424
        %v429 = vcombine.low %v425, %v425
        %430 = vrot.lane.b32.xlu0 %v428, 1
        %v431 = vpop.permute.xlu0 %430
        %432 = vrot.lane.b32.xlu0 %v424, 1
        %v433 = vpop.permute.xlu0 %432
        %434 = vrot.lane.b32.xlu0 %v429, 1
        %v435 = vpop.permute.xlu0 %434
        %vm436 = vcmask 7168
        %v437 = vsel %vm436, %v431, %v433
        %v438 = vsel %vm436, %v433, %v435
        %441 = vst [vmem:[#allocation3 + $0x10] sm:$0xf0] %v437
        %442 = vst [vmem:[#allocation3 + $0x18] sm:$0xf0] %v438
        %v443 = vld [vmem:[#allocation2 + $0x4] sm:$0xff]
        %v445 = vcombine.high %v443, %v443
        %447 = vst [vmem:[#allocation3 + $0x20] sm:$0xf] %v443
        %448 = vst [vmem:[#allocation3 + $0x28] sm:$0xf] %v445
        %v449 = vld [vmem:[#allocation2 + $0x4] sm:$0xff]
        %v450 = vld [vmem:[#allocation2 + $0xc] sm:$0xf]
        %v451 = vld [vmem:[%s367] ss:$2 sm:$0x3]
        %v453 = vlaneseq
        %v454 = vshrl.u32 %v453, 7
        %v455 = vsub.s32 0, %v454
        %v456 = vrot.slane %v451, %v455
        %v457 = vlaneseq
        %v458 = vshrl.u32 %v457, 7
        %v459 = vsub.s32 1, %v458
        %v460 = vrot.slane %v451, %v459
        %v461 = vcombine.low %v456, %v460
        %462 = vrot.lane.b32.xlu0 %v461, 1
        %v463 = vpop.permute.xlu0 %462
        %v464 = vrot.slane %v463, 4
        %v465 = vsel %vm436, %v464, %v463
        %v468 = vmul.f32 %v449, %v465
        %v469 = vmul.f32 %v450, %v464
        %v472 = vcombine.low %v468, %v468
        %v473 = vcombine.low %v469, %v469
        %474 = vrot.lane.b32.xlu0 %v472, 127
        %v475 = vpop.permute.xlu0 %474
        %476 = vrot.lane.b32.xlu0 %v468, 127
        %v477 = vpop.permute.xlu0 %476
        %478 = vrot.lane.b32.xlu0 %v473, 127
        %v479 = vpop.permute.xlu0 %478
        %v480 = vsel %vm420, %v475, %v477
        %v481 = vsel %vm420, %v477, %v479
        %484 = vst [vmem:[#allocation3 + $0x20] sm:$0xf0] %v480
        %485 = vst [vmem:[#allocation3 + $0x28] sm:$0xf0] %v481
        %v486 = vld [vmem:[#allocation2 + $0x4] sm:$0xff]
        %v487 = vld [vmem:[#allocation2 + $0xc] sm:$0xf]
        %v488 = vld [vmem:[%s7] ss:$2 sm:$0x3]
        %v490 = vlaneseq
        %v491 = vshrl.u32 %v490, 7
        %v492 = vsub.s32 0, %v491
        %v493 = vrot.slane %v488, %v492
        %v494 = vlaneseq
        %v495 = vshrl.u32 %v494, 7
        %v496 = vsub.s32 1, %v495
        %v497 = vrot.slane %v488, %v496
        %v498 = vcombine.low %v493, %v497
        %499 = vrot.lane.b32.xlu0 %v498, 15
        %v500 = vpop.permute.xlu0 %499
        %v501 = vrot.slane %v500, 4
        %v502 = vsel %vm397, %v501, %v500
        %v505 = vmul.f32 %v486, %v502
        %v506 = vmul.f32 %v487, %v501
        %v509 = vcombine.high %v505, %v505
        %510 = vrot.lane.b32.xlu0 %v505, 113
        %v511 = vpop.permute.xlu0 %510
        %512 = vrot.lane.b32.xlu0 %v509, 113
        %v513 = vpop.permute.xlu0 %512
        %514 = vrot.lane.b32.xlu0 %v506, 113
        %v515 = vpop.permute.xlu0 %514
        %v516 = vsel %vm382, %v511, %v513
        %v517 = vsel %vm382, %v513, %v515
        %520 = vst [vmem:[#allocation3 + $0x30] sm:$0xf] %v516
        %521 = vst [vmem:[#allocation3 + $0x38] sm:$0xf] %v517
        %v522 = vld [vmem:[#allocation2 + $0x4] sm:$0xff]
        %v523 = vld [vmem:[#allocation2 + $0xc] sm:$0xf]
        %v526 = vcombine.low %v522, %v522
        %v527 = vcombine.low %v523, %v523
        %528 = vrot.lane.b32.xlu0 %v526, 112
        %v529 = vpop.permute.xlu0 %528
        %530 = vrot.lane.b32.xlu0 %v522, 112
        %v531 = vpop.permute.xlu0 %530
        %532 = vrot.lane.b32.xlu0 %v527, 112
        %v533 = vpop.permute.xlu0 %532
        %vm534 = vcmask 916480
        %v535 = vsel %vm534, %v529, %v531
        %v536 = vsel %vm534, %v531, %v533
        %539 = vst [vmem:[#allocation3 + $0x30] sm:$0xf0] %v535
        %540 = vst [vmem:[#allocation3 + $0x38] sm:$0xf0] %v536
        %v541 = vld [vmem:[#allocation2 + $0x4] sm:$0xff]
        %v542 = vld [vmem:[#allocation2 + $0xc] sm:$0xf]
        %v543 = vld [vmem:[%s367] ss:$2 sm:$0x3]
        %v545 = vlaneseq
        %v546 = vshrl.u32 %v545, 7
        %v547 = vsub.s32 0, %v546
        %v548 = vrot.slane %v543, %v547
        %v549 = vlaneseq
        %v550 = vshrl.u32 %v549, 7
        %v551 = vsub.s32 1, %v550
        %v552 = vrot.slane %v543, %v551
        %v553 = vcombine.low %v548, %v552
        %554 = vrot.lane.b32.xlu0 %v553, 17
        %v555 = vpop.permute.xlu0 %554
        %v556 = vrot.slane %v555, 4
        %v557 = vsel %vm339, %v556, %v555
        %v560 = vmul.f32 %v541, %v557
        %v561 = vmul.f32 %v542, %v556
        %v564 = vcombine.high %v560, %v560
        %565 = vrot.lane.b32.xlu0 %v560, 111
        %v566 = vpop.permute.xlu0 %565
        %567 = vrot.lane.b32.xlu0 %v564, 111
        %v568 = vpop.permute.xlu0 %567
        %569 = vrot.lane.b32.xlu0 %v561, 111
        %v570 = vpop.permute.xlu0 %569
        %v571 = vsel %vm324, %v566, %v568
        %v572 = vsel %vm324, %v568, %v570
        %575 = vst [vmem:[#allocation3 + $0x40] sm:$0xf] %v571
        %576 = vst [vmem:[#allocation3 + $0x48] sm:$0xf] %v572
        %v577 = vld [vmem:[%s1] sm:$0xff]
        %v578 = vld [vmem:[%s1 + $0x8] sm:$0xff]
        %v579 = vld [vmem:[#allocation3] sm:$0xff]
        %v580 = vld [vmem:[#allocation3 + $0x8] sm:$0xff]
        %v581 = vld [vmem:[#allocation3 + $0x10] sm:$0xff]
        %v582 = vld [vmem:[#allocation3 + $0x18] sm:$0xff]
        %v583 = vld [vmem:[#allocation3 + $0x20] sm:$0xff]
        %v584 = vld [vmem:[#allocation3 + $0x28] sm:$0xff]
        %v585 = vld [vmem:[#allocation3 + $0x30] sm:$0xff]
        %v586 = vld [vmem:[#allocation3 + $0x38] sm:$0xff]
        %v587 = vld [vmem:[#allocation3 + $0x40] sm:$0xf]
        %v588 = vld [vmem:[#allocation3 + $0x48] sm:$0xf]
        %v589 = vld [vmem:[%s2] sm:$0xff]
        %v590 = vld [vmem:[%s2 + $0x8] sm:$0xff]
        %592 = vset.pattern.permute.xlu0 0
        %593 = vperm.xlu0 %592, %v589
        %v594 = vpop.permute.xlu0 %593
        %597 = vset.pattern.permute.xlu0 0
        %598 = vperm.xlu0 %597, %v590
        %v599 = vpop.permute.xlu0 %598
        %vm601 = vcmask 293888
        %v603 = vsel %vm601, %v577, 0
        %v606 = vsel %vm601, %v578, 0
        %vm608 = vcmask 1043456
        %v610 = vsel %vm608, %v587, 0
        %v613 = vsel %vm608, %v588, 0
        %615 = vmatprep.subr.mxu0 0.0
        %616 = vmatpush1.msra.mxu0 0.0
        %617 = vmatprep.subr.mxu0 0.0
        %618 = vmatpush1.msra.mxu0 0.0
        %619 = vmatprep.subr.mxu0 0.0
        %620 = vmatpush1.msra.mxu0 0.0
        %621 = vmatprep.subr.mxu0 0.0
        %622 = vmatpush1.msra.mxu0 0.0
        %623 = vmatprep.subr.mxu0 0.0
        %624 = vmatpush1.msra.mxu0 0.0
        %625 = vmatprep.subr.mxu0 0.0
        %626 = vmatpush1.msra.mxu0 0.0
        %627 = vmatprep.subr.mxu0 0.0
        %628 = vmatpush1.msra.mxu0 0.0
        %629 = vmatprep.subr.mxu0 0.0
        %630 = vmatpush1.msra.mxu0 0.0
        %631 = vmatprep.subr.mxu0 0.0
        %632 = vmatpush1.msra.mxu0 0.0
        %633 = vmatprep.subr.mxu0 0.0
        %634 = vmatpush1.msra.mxu0 0.0
        %635 = vmatprep.subr.mxu0 0.0
        %636 = vmatpush1.msra.mxu0 0.0
        %637 = vmatprep.subr.mxu0 %v613
        %638 = vmatpush1.msra.mxu0 %v610
        %639 = vmatprep.subr.mxu0 %v586
        %640 = vmatpush1.msra.mxu0 %v585
        %641 = vmatprep.subr.mxu0 %v584
        %642 = vmatpush1.msra.mxu0 %v583
        %643 = vmatprep.subr.mxu0 %v582
        %644 = vmatpush1.msra.mxu0 %v581
        %645 = vmatprep.subr.mxu0 %v580
        %646 = vmatpush1.msra.mxu0 %v579
        %647 = vmatprep.subr.mxu0 0.0
        %648 = vmatpush2.msra.mxu0 0.0
        %649 = vmatprep.subr.mxu0 0.0
        %650 = vmatpush2.msra.mxu0 0.0
        %651 = vmatprep.subr.mxu0 0.0
        %652 = vmatpush2.msra.mxu0 0.0
        %653 = vmatprep.subr.mxu0 0.0
        %654 = vmatpush2.msra.mxu0 0.0
        %655 = vmatprep.subr.mxu0 0.0
        %656 = vmatpush2.msra.mxu0 0.0
        %657 = vmatprep.subr.mxu0 0.0
        %658 = vmatpush2.msra.mxu0 0.0
        %659 = vmatprep.subr.mxu0 0.0
        %660 = vmatpush2.msra.mxu0 0.0
        %661 = vmatprep.subr.mxu0 0.0
        %662 = vmatpush2.msra.mxu0 0.0
        %663 = vmatprep.subr.mxu0 0.0
        %664 = vmatpush2.msra.mxu0 0.0
        %665 = vmatprep.subr.mxu0 0.0
        %666 = vmatpush2.msra.mxu0 0.0
        %667 = vmatprep.subr.mxu0 0.0
        %668 = vmatpush2.msra.mxu0 0.0
        %669 = vmatprep.subr.mxu0 0.0
        %670 = vmatpush2.msra.mxu0 0.0
        %671 = vmatprep.subr.mxu0 0.0
        %672 = vmatpush2.msra.mxu0 0.0
        %673 = vmatprep.subr.mxu0 0.0
        %674 = vmatpush2.msra.mxu0 0.0
        %675 = vmatprep.subr.mxu0 0.0
        %676 = vmatpush2.msra.mxu0 0.0
        %677 = vmatprep.subr.mxu0 0.0
        %678 = vmatpush2.msra.mxu0 0.0
        %679 = vmatprep.mubr.f32.mxu0 0.0
        %680 = vmatmul.mubr.f32.gmra.mxu0 %v603
        %v681 = vpop.f32.mrf.mxu0
        %v682 = vadd.f32 %v594, %v681
        %v683 = vpop.f32.mrf.mxu0
        %v684 = vadd.f32 %v594, %v683
        %685 = vmatprep.mubr.f32.mxu0 0.0
        %686 = vmatmul.mubr.f32.gmra.mxu0 %v606
        %v687 = vpop.f32.mrf.mxu0
        %v688 = vadd.f32 %v599, %v687
        %v689 = vpop.f32.mrf.mxu0
        %v690 = vadd.f32 %v599, %v689
        %691 = vdwg.mxu0
        %v692 = vmax.f32 %v682, 0.0
        %v693 = vmax.f32 %v684, 0.0
        %v694 = vmax.f32 %v688, 0.0
        %v695 = vmax.f32 %v690, 0.0
        %v696 = vadd.f32 %v692, %v694
        %v697 = vadd.f32 %v693, %v695
        %v698 = vadd.f32 %v696, %v697
        %699 = vadd.xlane.f32.xlu0 %v698
        %v700 = vpop.xlane.xlu0 %699
        %v701 = vmul.f32 %v700, 0.00390625
        %v702 = vld [vmem:[%s3] sm:$0xff]
        %v703 = vld [vmem:[%s3 + $0x8] sm:$0xff]
        %v704 = vld [vmem:[%s3 + $0x10] sm:$0xff]
        %v705 = vld [vmem:[%s3 + $0x18] sm:$0xff]
        %v706 = vld [vmem:[%s4] sm:$0xff]
        %v707 = vld [vmem:[%s4 + $0x8] sm:$0xff]
        %v708 = vld [vmem:[%s4 + $0x10] sm:$0xff]
        %v709 = vld [vmem:[%s4 + $0x18] sm:$0xff]
        %vm710 = vcmask 64512
        %v712 = vsel %vm710, %v702, 0
        %v715 = vsel %vm710, %v703, 0
        %v718 = vsel %vm710, %v704, 0
        %v721 = vsel %vm710, %v705, 0
        %723 = vmatprep.subr.mxu0 0.0
        %724 = vmatpush1.msra.mxu0 0.0
        %725 = vmatprep.subr.mxu0 0.0
        %726 = vmatpush1.msra.mxu0 0.0
        %727 = vmatprep.subr.mxu0 0.0
        %728 = vmatpush1.msra.mxu0 0.0
        %729 = vmatprep.subr.mxu0 0.0
        %730 = vmatpush1.msra.mxu0 0.0
        %731 = vmatprep.subr.mxu0 0.0
        %732 = vmatpush1.msra.mxu0 0.0
        %733 = vmatprep.subr.mxu0 0.0
        %734 = vmatpush1.msra.mxu0 0.0
        %735 = vmatprep.subr.mxu0 0.0
        %736 = vmatpush1.msra.mxu0 0.0
        %737 = vmatprep.subr.mxu0 0.0
        %738 = vmatpush1.msra.mxu0 0.0
        %739 = vmatprep.subr.mxu0 0.0
        %740 = vmatpush1.msra.mxu0 0.0
        %741 = vmatprep.subr.mxu0 0.0
        %742 = vmatpush1.msra.mxu0 0.0
        %743 = vmatprep.subr.mxu0 0.0
        %744 = vmatpush1.msra.mxu0 0.0
        %745 = vmatprep.subr.mxu0 0.0
        %746 = vmatpush1.msra.mxu0 0.0
        %747 = vmatprep.subr.mxu0 0.0
        %748 = vmatpush1.msra.mxu0 0.0
        %749 = vmatprep.subr.mxu0 0.0
        %750 = vmatpush1.msra.mxu0 0.0
        %751 = vmatprep.subr.mxu0 0.0
        %752 = vmatpush1.msra.mxu0 0.0
        %753 = vmatprep.subr.mxu0 0.0
        %754 = vmatpush1.msra.mxu0 %v701
        %755 = vmatprep.subr.mxu0 0.0
        %756 = vmatpush2.msra.mxu0 0.0
        %757 = vmatprep.subr.mxu0 0.0
        %758 = vmatpush2.msra.mxu0 0.0
        %759 = vmatprep.subr.mxu0 0.0
        %760 = vmatpush2.msra.mxu0 0.0
        %761 = vmatprep.subr.mxu0 0.0
        %762 = vmatpush2.msra.mxu0 0.0
        %763 = vmatprep.subr.mxu0 0.0
        %764 = vmatpush2.msra.mxu0 0.0
        %765 = vmatprep.subr.mxu0 0.0
        %766 = vmatpush2.msra.mxu0 0.0
        %767 = vmatprep.subr.mxu0 0.0
        %768 = vmatpush2.msra.mxu0 0.0
        %769 = vmatprep.subr.mxu0 0.0
        %770 = vmatpush2.msra.mxu0 0.0
        %771 = vmatprep.subr.mxu0 0.0
        %772 = vmatpush2.msra.mxu0 0.0
        %773 = vmatprep.subr.mxu0 0.0
        %774 = vmatpush2.msra.mxu0 0.0
        %775 = vmatprep.subr.mxu0 0.0
        %776 = vmatpush2.msra.mxu0 0.0
        %777 = vmatprep.subr.mxu0 0.0
        %778 = vmatpush2.msra.mxu0 0.0
        %779 = vmatprep.subr.mxu0 0.0
        %780 = vmatpush2.msra.mxu0 0.0
        %781 = vmatprep.subr.mxu0 0.0
        %782 = vmatpush2.msra.mxu0 0.0
        %783 = vmatprep.subr.mxu0 0.0
        %784 = vmatpush2.msra.mxu0 0.0
        %785 = vmatprep.subr.mxu0 0.0
        %786 = vmatpush2.msra.mxu0 0.0
        %787 = vmatprep.mubr.f32.mxu0 0.0
        %788 = vmatmul.mubr.f32.gmra.mxu0 %v712
        %v789 = vpop.f32.mrf.mxu0
        %v790 = vadd.f32 %v706, %v789
        %v791 = vpop.f32.mrf.mxu0
        %792 = vmatprep.mubr.f32.mxu0 0.0
        %793 = vmatmul.mubr.f32.gmra.mxu0 %v715
        %v794 = vpop.f32.mrf.mxu0
        %v795 = vadd.f32 %v707, %v794
        %v796 = vpop.f32.mrf.mxu0
        %797 = vmatprep.mubr.f32.mxu0 0.0
        %798 = vmatmul.mubr.f32.gmra.mxu0 %v718
        %v799 = vpop.f32.mrf.mxu0
        %v800 = vadd.f32 %v708, %v799
        %v801 = vpop.f32.mrf.mxu0
        %802 = vmatprep.mubr.f32.mxu0 0.0
        %803 = vmatmul.mubr.f32.gmra.mxu0 %v721
        %v804 = vpop.f32.mrf.mxu0
        %v805 = vadd.f32 %v709, %v804
        %v806 = vpop.f32.mrf.mxu0
        %807 = vdwg.mxu0
        %v808 = vmax.f32 %v790, 0.0
        %v809 = vmax.f32 %v795, 0.0
        %v810 = vmax.f32 %v800, 0.0
        %v811 = vmax.f32 %v805, 0.0
        %v812 = vld [vmem:[%s5] sm:$0xff]
        %v813 = vld [vmem:[%s5 + $0x8] sm:$0xff]
        %v814 = vld [vmem:[%s6] sm:$0xff]
        %v815 = vld [vmem:[%s6 + $0x8] sm:$0xff]
        %vm816 = vcmask 261120
        %v818 = vsel %vm816, %v812, 0
        %v821 = vsel %vm816, %v813, 0
        %823 = vmatprep.subr.mxu0 0.0
        %824 = vmatpush1.msra.mxu0 0.0
        %825 = vmatprep.subr.mxu0 0.0
        %826 = vmatpush1.msra.mxu0 0.0
        %827 = vmatprep.subr.mxu0 0.0
        %828 = vmatpush1.msra.mxu0 0.0
        %829 = vmatprep.subr.mxu0 0.0
        %830 = vmatpush1.msra.mxu0 0.0
        %831 = vmatprep.subr.mxu0 0.0
        %832 = vmatpush1.msra.mxu0 0.0
        %833 = vmatprep.subr.mxu0 0.0
        %834 = vmatpush1.msra.mxu0 0.0
        %835 = vmatprep.subr.mxu0 0.0
        %836 = vmatpush1.msra.mxu0 0.0
        %837 = vmatprep.subr.mxu0 0.0
        %838 = vmatpush1.msra.mxu0 0.0
        %839 = vmatprep.subr.mxu0 0.0
        %840 = vmatpush1.msra.mxu0 0.0
        %841 = vmatprep.subr.mxu0 0.0
        %842 = vmatpush1.msra.mxu0 0.0
        %843 = vmatprep.subr.mxu0 0.0
        %844 = vmatpush1.msra.mxu0 0.0
        %845 = vmatprep.subr.mxu0 0.0
        %846 = vmatpush1.msra.mxu0 0.0
        %847 = vmatprep.subr.mxu0 0.0
        %848 = vmatpush1.msra.mxu0 %v811
        %849 = vmatprep.subr.mxu0 0.0
        %850 = vmatpush1.msra.mxu0 %v810
        %851 = vmatprep.subr.mxu0 0.0
        %852 = vmatpush1.msra.mxu0 %v809
        %853 = vmatprep.subr.mxu0 0.0
        %854 = vmatpush1.msra.mxu0 %v808
        %855 = vmatprep.subr.mxu0 0.0
        %856 = vmatpush2.msra.mxu0 0.0
        %857 = vmatprep.subr.mxu0 0.0
        %858 = vmatpush2.msra.mxu0 0.0
        %859 = vmatprep.subr.mxu0 0.0
        %860 = vmatpush2.msra.mxu0 0.0
        %861 = vmatprep.subr.mxu0 0.0
        %862 = vmatpush2.msra.mxu0 0.0
        %863 = vmatprep.subr.mxu0 0.0
        %864 = vmatpush2.msra.mxu0 0.0
        %865 = vmatprep.subr.mxu0 0.0
        %866 = vmatpush2.msra.mxu0 0.0
        %867 = vmatprep.subr.mxu0 0.0
        %868 = vmatpush2.msra.mxu0 0.0
        %869 = vmatprep.subr.mxu0 0.0
        %870 = vmatpush2.msra.mxu0 0.0
        %871 = vmatprep.subr.mxu0 0.0
        %872 = vmatpush2.msra.mxu0 0.0
        %873 = vmatprep.subr.mxu0 0.0
        %874 = vmatpush2.msra.mxu0 0.0
        %875 = vmatprep.subr.mxu0 0.0
        %876 = vmatpush2.msra.mxu0 0.0
        %877 = vmatprep.subr.mxu0 0.0
        %878 = vmatpush2.msra.mxu0 0.0
        %879 = vmatprep.subr.mxu0 0.0
        %880 = vmatpush2.msra.mxu0 0.0
        %881 = vmatprep.subr.mxu0 0.0
        %882 = vmatpush2.msra.mxu0 0.0
        %883 = vmatprep.subr.mxu0 0.0
        %884 = vmatpush2.msra.mxu0 0.0
        %885 = vmatprep.subr.mxu0 0.0
        %886 = vmatpush2.msra.mxu0 0.0
        %887 = vmatprep.mubr.f32.mxu0 0.0
        %888 = vmatmul.mubr.f32.gmra.mxu0 %v818
        %v889 = vpop.f32.mrf.mxu0
        %v890 = vadd.f32 %v814, %v889
        %v891 = vpop.f32.mrf.mxu0
        %892 = vmatprep.mubr.f32.mxu0 0.0
        %893 = vmatmul.mubr.f32.gmra.mxu0 %v821
        %v894 = vpop.f32.mrf.mxu0
        %v895 = vadd.f32 %v815, %v894
        %v896 = vpop.f32.mrf.mxu0
        %897 = vdwg.mxu0
        %v898 = vmax.f32 %v890, %v895
        %v899 = vsub.f32 %v890, %v898
        %v900 = vmul.f32 %v899, 1.442695
        %v901 = vpow.pop %v900
        %v902 = vsub.f32 %v895, %v898
        %v903 = vmul.f32 %v902, 1.442695
        %v904 = vpow.pop %v903
        %v905 = vadd.f32 %v901, %v904
        %v906 = vrcp.pop %v905
        %v907 = vmul.f32 %v901, %v906
        %v908 = vmul.f32 %v904, %v906
        %910 = vset.pattern.permute.xlu0 0
        %911 = vperm.xlu0 %910, %v907
        %v912 = vpop.permute.xlu0 %911
        %v914 = vmul.f32 %v912, %v692
        %v915 = vmul.f32 %v912, %v693
        %917 = vset.pattern.permute.xlu0 0
        %918 = vperm.xlu0 %917, %v908
        %v919 = vpop.permute.xlu0 %918
        %v921 = vmul.f32 %v919, %v694
        %v922 = vmul.f32 %v919, %v695
        %v923 = vadd.f32 %v914, %v921
        %v924 = vadd.f32 %v915, %v922
        %925 = vst [vmem:[%s298] sm:$0xff] %v923
        %926 = vst [vmem:[%s298 + $0x8] sm:$0xff] %v924
        %s927 = sand.u32 %s203, 1
        %s928 = scalar_lea.sflag [#allocation5], %s927
        %s929 = sand.u32 %s203, 1
        %s930 = smul.addr %s929, 16
        %s931 = scalar_lea.vmem [#allocation4], %s930
        // Predicated region
        $region53: #{tpu_custom_call.1} parent=51 // pred_check
          %p932 = pneg %p213
        $region54: #{tpu_custom_call.1} parent=51 // pred_check_branch
          %934 = sbr.rel (%p932) target = $region56
        $region55: #{tpu_custom_call.1} parent=51 // pred_region
          %s936 = ssub.s32 256, 256
          %937 = vsyncadd %s928, %s936
          %s938 = smul.addr %s22, 2
          %s939 = smul.addr %s938, 128
          %s940 = scalar_lea.hbm %s8, %s939
          %s942 = sshll.u32 %s931, 4
          %s943 = int_to_ptr.vmem [resolvable:$true] %s942
          %945 = dma.vmem_to_hbm [thread:$0]  %s943, 256, %s940, %s928
        $region56: #{tpu_custom_call.1} parent=51 // pred_fallthru
          _
      $region52: #{tpu_custom_call.1} parent=5 // pred_fallthru
        _
      %p946 = scmp.le.s32.totalorder 2, %s17
      // Predicated region
      $region57: #{tpu_custom_call.1} parent=5 // pred_check
        %p947 = pneg %p946
      $region58: #{tpu_custom_call.1} parent=5 // pred_check_branch
        %949 = sbr.rel (%p947) target = $region60
      $region59: #{tpu_custom_call.1} parent=5 // pred_region
        %s950 = ssub.s32 %s17, 2
        // Predicated region
        $region61: #{tpu_custom_call.1} parent=59 // pred_check
          %p951 = pneg %p219
        $region62: #{tpu_custom_call.1} parent=59 // pred_check_branch
          %953 = sbr.rel (%p951) target = $region64
        $region63: #{tpu_custom_call.1} parent=59 // pred_region
          %s954 = sand.u32 %s204, 1
          %s955 = scalar_lea.sflag [#allocation5], %s954
          %s956 = sand.u32 %s204, 1
          %s957 = smul.addr %s956, 16
          %s958 = scalar_lea.vmem [#allocation4], %s957
          %959 = dma.done %s955, 256
        $region64: #{tpu_custom_call.1} parent=59 // pred_fallthru
          _
      $region60: #{tpu_custom_call.1} parent=5 // pred_fallthru
        _
    $region6: #{tpu_custom_call.1} parent=1 // loop_footer
      %s21 = sadd.s32 1, %s17
    $region7: #{tpu_custom_call.1} parent=1 // loop_footer_branch
      %16 = sbr.rel target = $region3
    $region8: #{tpu_custom_call.1} parent=1 // loop_exit
      _
    %960 = vsyncpa [#allocation5], 1
    %s961 = scalar_lea.sflag [#allocation5], 1
    %962 = vsyncpa %s961, 1

</llo_original>
